<compile_context>
chip_gen: v7x
topology: tpu7x:2x2x1
jax: 0.10.0
libtpu: 0.0.40
codegen_flags: <defaults>
</compile_context>

<pallas_src>
import functools

import jax
import jax.numpy as jnp
from jax import lax
from jax.experimental import pallas as pl
from jax.experimental.pallas import tpu as pltpu


def _residual_conv_kernel(H, K, WCin, WCout,
                          xp_ref, w1_ref, w2_ref,
                          sc1_ref, bi1_ref, sc2_ref, bi2_ref,
                          out_ref):
    """One image per grid step, lane-packed (H, W*C) layout."""
    p = K // 2
    xfull = xp_ref[0]                                   # (H + 2p, W*Cin) f32, row-padded

    # ---- Conv1 ('same'): width taps already folded into banded weights; the
    # K height taps are row-window slices of the padded block.  bf16 MXU
    # operands, f32 accumulation.
    acc1 = jnp.zeros((H, WCout), jnp.float32)
    for kh in range(K):
        lhs = xfull[kh:kh + H, :].astype(jnp.bfloat16)
        acc1 = acc1 + jnp.dot(lhs, w1_ref[kh], preferred_element_type=jnp.float32)
    # BN1 (scale / bias with conv bias folded in) + ReLU, f32.
    h = jnp.maximum(acc1 * sc1_ref[...] + bi1_ref[...], 0.0)

    # ---- Conv2 ('same'): h stays in registers; value-level zero row pad
    # supplies the height halo (no VMEM scratch round-trip).
    zrow = jnp.zeros((p, WCout), jnp.float32)
    hpad = jnp.concatenate([zrow, h, zrow], axis=0)     # (H + 2p, W*Cout)
    acc2 = jnp.zeros((H, WCout), jnp.float32)
    for kh in range(K):
        lhs = hpad[kh:kh + H, :].astype(jnp.bfloat16)
        acc2 = acc2 + jnp.dot(lhs, w2_ref[kh], preferred_element_type=jnp.float32)
    c = acc2 * sc2_ref[...] + bi2_ref[...]              # BN2 (conv bias folded in)

    # ---- residual: y = x + ReLU(c); residual read from the interior of the
    # padded input block (no duplicate x input), kept in f32.
    x_res = xfull[p:p + H, :]
    out_ref[0] = (x_res + jnp.maximum(c, 0.0)).astype(out_ref.dtype)


def _band_weights(w, W):
    """(K, K, Cin, Cout) HWIO -> (K, W*Cin, W*Cout): width taps folded into a
    banded matrix per height tap (implicit 'same' width zero-padding)."""
    K, _, Cin, Cout = w.shape
    p = K // 2
    bands = []
    for kh in range(K):
        m = jnp.zeros((W * Cin, W * Cout), w.dtype)
        for kw in range(K):
            m = m + jnp.kron(jnp.eye(W, W, k=p - kw, dtype=w.dtype), w[kh, kw])
        bands.append(m)
    return jnp.stack(bands)


def residual_conv_pallas(x_nchw, params, K):
    """x_nchw: (N, C, H, W) float32. Returns (N, C, H, W)."""
    w1, b1, s1, t1, w2, b2, s2, t2 = params
    N, Cin, H, W = x_nchw.shape
    Cout = w1.shape[-1]
    assert Cin == Cout, "ResidualConv requires input_channel == output_channel"
    assert K % 2 == 1, "'same' padding implemented for odd kernel sizes"
    p = K // 2
    WCin, WCout = W * Cin, W * Cout

    # ---- wrapper-side prep (trace-time, not per grid step) ----
    # lane-packed NHWC -> (N, H, W*C); rows zero-padded for the height taps.
    x_pk = jnp.transpose(x_nchw, (0, 2, 3, 1)).reshape(N, H, WCin)
    x_pk = jnp.pad(x_pk, ((0, 0), (p, p), (0, 0)))

    # width taps folded into banded matrices, cast to bf16 for the MXU.
    w1b = _band_weights(w1, W).astype(jnp.bfloat16)          # (K, WCin, WCout)
    w2b = _band_weights(w2, W).astype(jnp.bfloat16)          # (K, WCout, WCout)

    # conv bias folded into BN bias, tiled to the packed (W*Cout) lane layout.
    sc1 = jnp.tile(s1, (1, W)).astype(jnp.float32)           # (1, WCout)
    bi1 = jnp.tile(t1 + b1 * s1, (1, W)).astype(jnp.float32)
    sc2 = jnp.tile(s2, (1, W)).astype(jnp.float32)
    bi2 = jnp.tile(t2 + b2 * s2, (1, W)).astype(jnp.float32)

    kernel = functools.partial(_residual_conv_kernel, H, K, WCin, WCout)
    const3 = lambda n: (0, 0, 0)
    const2 = lambda n: (0, 0)

    out_pk = pl.pallas_call(
        kernel,
        out_shape=jax.ShapeDtypeStruct((N, H, WCout), x_nchw.dtype),
        grid=(N,),
        in_specs=[
            pl.BlockSpec((1, H + 2 * p, WCin), lambda n: (n, 0, 0)),
            pl.BlockSpec((K, WCin, WCout), const3),
            pl.BlockSpec((K, WCout, WCout), const3),
            pl.BlockSpec((1, WCout), const2),
            pl.BlockSpec((1, WCout), const2),
            pl.BlockSpec((1, WCout), const2),
            pl.BlockSpec((1, WCout), const2),
        ],
        out_specs=pl.BlockSpec((1, H, WCout), lambda n: (n, 0, 0)),
        compiler_params=pltpu.CompilerParams(
            dimension_semantics=("parallel",)),
    )(x_pk, w1b, w2b, sc1, bi1, sc2, bi2)

    out = out_pk.reshape(N, H, W, Cout)
    return jnp.transpose(out, (0, 3, 1, 2))                  # back to NCHW


def reference_jax(x_nchw, params, use_bf16=True):
    """Pure-JAX reference (eval-mode ResidualConv, pool=False).  With
    use_bf16=True the conv operands are quantized exactly like the kernel
    (bf16 MXU operands, f32 accumulation, f32 elementwise math)."""
    w1, b1, s1, t1, w2, b2, s2, t2 = params
    cdt = jnp.bfloat16 if use_bf16 else jnp.float32
    x = jnp.transpose(x_nchw, (0, 2, 3, 1))                  # NHWC, f32
    dn = ('NHWC', 'HWIO', 'NHWC')
    y = lax.conv_general_dilated(x.astype(cdt), w1.astype(cdt), (1, 1), 'SAME',
                                 dimension_numbers=dn,
                                 preferred_element_type=jnp.float32)
    y = jnp.maximum(y * s1[0] + (t1 + b1 * s1)[0], 0.0)
    y = lax.conv_general_dilated(y.astype(cdt), w2.astype(cdt), (1, 1), 'SAME',
                                 dimension_numbers=dn,
                                 preferred_element_type=jnp.float32)
    y = y * s2[0] + (t2 + b2 * s2)[0]
    out = x + jnp.maximum(y, 0.0)
    return jnp.transpose(out, (0, 3, 1, 2))


def make_params(key, K, Cin, Cout):
    """Deterministic synthetic params. BN folded to scale/bias (eval mode)."""
    keys = jax.random.split(key, 10)
    eps = 1e-5

    w1 = jax.random.normal(keys[0], (K, K, Cin, Cout), jnp.float32) * 0.1
    b1 = jax.random.normal(keys[1], (1, Cout), jnp.float32) * 0.1
    g1 = 1.0 + 0.1 * jax.random.normal(keys[2], (Cout,), jnp.float32)
    beta1 = 0.1 * jax.random.normal(keys[3], (Cout,), jnp.float32)
    mean1 = 0.1 * jax.random.normal(keys[4], (Cout,), jnp.float32)
    var1 = jnp.abs(jax.random.normal(keys[5], (Cout,), jnp.float32)) + 0.5
    s1 = (g1 / jnp.sqrt(var1 + eps))[None, :]
    t1 = (beta1 - mean1 * g1 / jnp.sqrt(var1 + eps))[None, :]

    w2 = jax.random.normal(keys[6], (K, K, Cout, Cout), jnp.float32) * 0.1
    b2 = jax.random.normal(keys[7], (1, Cout), jnp.float32) * 0.1
    g2 = 1.0 + 0.1 * jax.random.normal(keys[8], (Cout,), jnp.float32)
    beta2 = 0.1 * jax.random.normal(keys[9], (Cout,), jnp.float32)
    mean2 = jnp.zeros((Cout,), jnp.float32)
    var2 = jnp.ones((Cout,), jnp.float32)
    s2 = (g2 / jnp.sqrt(var2 + eps))[None, :]
    t2 = (beta2 - mean2 * g2 / jnp.sqrt(var2 + eps))[None, :]

    return (w1, b1, s1, t1, w2, b2, s2, t2)


if __name__ == "__main__":
    # input_channel == output_channel (required by the module); C=8, W=16 makes
    # the packed row exactly 128 lanes wide.
    N, C, H, W = 2, 8, 16, 16
    K = 3

    key = jax.random.PRNGKey(0)
    kx, kp = jax.random.split(key)
    x = jax.random.normal(kx, (N, C, H, W), jnp.float32)
    params = make_params(kp, K, C, C)

    out = residual_conv_pallas(x, params, K)
    out = jax.block_until_ready(out)

    ref = jax.block_until_ready(reference_jax(x, params, use_bf16=True))
    assert out.shape == (N, C, H, W)
    assert jnp.allclose(out, ref, atol=1e-2, rtol=1e-2), \
        float(jnp.max(jnp.abs(out - ref)))

    print("KERNEL_OK")
</pallas_src>

<mosaic_0001>
module attributes {stable_mosaic.version = 11 : i64} {
  func.func @_residual_conv_kernel(%arg0: i32, %arg1: memref<1x18x128xf32, #tpu.memory_space<vmem>>, %arg2: memref<3x128x128xbf16, #tpu.memory_space<vmem>>, %arg3: memref<3x128x128xbf16, #tpu.memory_space<vmem>>, %arg4: memref<1x128xf32, #tpu.memory_space<vmem>>, %arg5: memref<1x128xf32, #tpu.memory_space<vmem>>, %arg6: memref<1x128xf32, #tpu.memory_space<vmem>>, %arg7: memref<1x128xf32, #tpu.memory_space<vmem>>, %arg8: memref<1x16x128xf32, #tpu.memory_space<vmem>>) attributes {dimension_semantics = [#tpu.dimension_semantics<parallel>], iteration_bounds = array<i64: 2>, scalar_prefetch = 0 : i64, scratch_operands = 0 : i64, tpu.core_type = #tpu.core_type<tc>, window_params = [{transform_indices = @transform_0, window_bounds = array<i64: 1, 18, 128>}, {pipeline_mode = #tpu.pipeline_mode<synchronous>, transform_indices = @transform_1, window_bounds = array<i64: 3, 128, 128>}, {pipeline_mode = #tpu.pipeline_mode<synchronous>, transform_indices = @transform_2, window_bounds = array<i64: 3, 128, 128>}, {pipeline_mode = #tpu.pipeline_mode<synchronous>, transform_indices = @transform_3, window_bounds = array<i64: 1, 128>}, {pipeline_mode = #tpu.pipeline_mode<synchronous>, transform_indices = @transform_4, window_bounds = array<i64: 1, 128>}, {pipeline_mode = #tpu.pipeline_mode<synchronous>, transform_indices = @transform_5, window_bounds = array<i64: 1, 128>}, {pipeline_mode = #tpu.pipeline_mode<synchronous>, transform_indices = @transform_6, window_bounds = array<i64: 1, 128>}, {transform_indices = @transform_7, window_bounds = array<i64: 1, 16, 128>}]} {
    %c0 = arith.constant 0 : index
    %c0_0 = arith.constant 0 : index
    %c0_1 = arith.constant 0 : index
    %0 = vector.load %arg1[%c0, %c0_0, %c0_1] : memref<1x18x128xf32, #tpu.memory_space<vmem>>, vector<1x18x128xf32>
    %1 = vector.shape_cast %0 : vector<1x18x128xf32> to vector<18x128xf32>
    %cst = arith.constant 0.000000e+00 : f32
    %2 = vector.broadcast %cst : f32 to vector<16x128xf32>
    %3 = vector.extract_strided_slice %1 {offsets = [0, 0], sizes = [16, 128], strides = [1, 1]} : vector<18x128xf32> to vector<16x128xf32>
    %4 = arith.truncf %3 : vector<16x128xf32> to vector<16x128xbf16>
    %c0_2 = arith.constant 0 : index
    %c0_3 = arith.constant 0 : index
    %c0_4 = arith.constant 0 : index
    %5 = vector.load %arg2[%c0_2, %c0_3, %c0_4] : memref<3x128x128xbf16, #tpu.memory_space<vmem>>, vector<1x128x128xbf16>
    %6 = vector.shape_cast %5 : vector<1x128x128xbf16> to vector<128x128xbf16>
    %cst_5 = arith.constant dense<0.000000e+00> : vector<16x128xf32>
    %7 = tpu.matmul %4, %6, %cst_5 {dimension_numbers = #tpu.dot_dimension_numbers<[1], [0], [0], [1], [0, 0, 1, 1], [], []>} : vector<16x128xbf16>, vector<128x128xbf16>, vector<16x128xf32> -> vector<16x128xf32>
    %8 = arith.addf %2, %7 : vector<16x128xf32>
    %9 = vector.extract_strided_slice %1 {offsets = [1, 0], sizes = [16, 128], strides = [1, 1]} : vector<18x128xf32> to vector<16x128xf32>
    %10 = arith.truncf %9 : vector<16x128xf32> to vector<16x128xbf16>
    %c1 = arith.constant 1 : index
    %c0_6 = arith.constant 0 : index
    %c0_7 = arith.constant 0 : index
    %11 = vector.load %arg2[%c1, %c0_6, %c0_7] : memref<3x128x128xbf16, #tpu.memory_space<vmem>>, vector<1x128x128xbf16>
    %12 = vector.shape_cast %11 : vector<1x128x128xbf16> to vector<128x128xbf16>
    %cst_8 = arith.constant dense<0.000000e+00> : vector<16x128xf32>
    %13 = tpu.matmul %10, %12, %cst_8 {dimension_numbers = #tpu.dot_dimension_numbers<[1], [0], [0], [1], [0, 0, 1, 1], [], []>} : vector<16x128xbf16>, vector<128x128xbf16>, vector<16x128xf32> -> vector<16x128xf32>
    %14 = arith.addf %8, %13 : vector<16x128xf32>
    %15 = vector.extract_strided_slice %1 {offsets = [2, 0], sizes = [16, 128], strides = [1, 1]} : vector<18x128xf32> to vector<16x128xf32>
    %16 = arith.truncf %15 : vector<16x128xf32> to vector<16x128xbf16>
    %c2 = arith.constant 2 : index
    %c0_9 = arith.constant 0 : index
    %c0_10 = arith.constant 0 : index
    %17 = vector.load %arg2[%c2, %c0_9, %c0_10] : memref<3x128x128xbf16, #tpu.memory_space<vmem>>, vector<1x128x128xbf16>
    %18 = vector.shape_cast %17 : vector<1x128x128xbf16> to vector<128x128xbf16>
    %cst_11 = arith.constant dense<0.000000e+00> : vector<16x128xf32>
    %19 = tpu.matmul %16, %18, %cst_11 {dimension_numbers = #tpu.dot_dimension_numbers<[1], [0], [0], [1], [0, 0, 1, 1], [], []>} : vector<16x128xbf16>, vector<128x128xbf16>, vector<16x128xf32> -> vector<16x128xf32>
    %20 = arith.addf %14, %19 : vector<16x128xf32>
    %c0_12 = arith.constant 0 : index
    %c0_13 = arith.constant 0 : index
    %21 = vector.load %arg4[%c0_12, %c0_13] : memref<1x128xf32, #tpu.memory_space<vmem>>, vector<1x128xf32>
    %22 = vector.broadcast %21 : vector<1x128xf32> to vector<16x128xf32>
    %23 = arith.mulf %20, %22 : vector<16x128xf32>
    %c0_14 = arith.constant 0 : index
    %c0_15 = arith.constant 0 : index
    %24 = vector.load %arg5[%c0_14, %c0_15] : memref<1x128xf32, #tpu.memory_space<vmem>>, vector<1x128xf32>
    %25 = vector.broadcast %24 : vector<1x128xf32> to vector<16x128xf32>
    %26 = arith.addf %23, %25 : vector<16x128xf32>
    %cst_16 = arith.constant 0.000000e+00 : f32
    %27 = vector.broadcast %cst_16 : f32 to vector<16x128xf32>
    %28 = arith.maximumf %26, %27 : vector<16x128xf32>
    %cst_17 = arith.constant 0.000000e+00 : f32
    %29 = vector.broadcast %cst_17 : f32 to vector<1x128xf32>
    %30 = tpu.concatenate %29, %28, %29 in 0 : vector<1x128xf32>, vector<16x128xf32>, vector<1x128xf32> -> vector<18x128xf32>
    %cst_18 = arith.constant 0.000000e+00 : f32
    %31 = vector.broadcast %cst_18 : f32 to vector<16x128xf32>
    %32 = vector.extract_strided_slice %30 {offsets = [0, 0], sizes = [16, 128], strides = [1, 1]} : vector<18x128xf32> to vector<16x128xf32>
    %33 = arith.truncf %32 : vector<16x128xf32> to vector<16x128xbf16>
    %c0_19 = arith.constant 0 : index
    %c0_20 = arith.constant 0 : index
    %c0_21 = arith.constant 0 : index
    %34 = vector.load %arg3[%c0_19, %c0_20, %c0_21] : memref<3x128x128xbf16, #tpu.memory_space<vmem>>, vector<1x128x128xbf16>
    %35 = vector.shape_cast %34 : vector<1x128x128xbf16> to vector<128x128xbf16>
    %cst_22 = arith.constant dense<0.000000e+00> : vector<16x128xf32>
    %36 = tpu.matmul %33, %35, %cst_22 {dimension_numbers = #tpu.dot_dimension_numbers<[1], [0], [0], [1], [0, 0, 1, 1], [], []>} : vector<16x128xbf16>, vector<128x128xbf16>, vector<16x128xf32> -> vector<16x128xf32>
    %37 = arith.addf %31, %36 : vector<16x128xf32>
    %38 = vector.extract_strided_slice %30 {offsets = [1, 0], sizes = [16, 128], strides = [1, 1]} : vector<18x128xf32> to vector<16x128xf32>
    %39 = arith.truncf %38 : vector<16x128xf32> to vector<16x128xbf16>
    %c1_23 = arith.constant 1 : index
    %c0_24 = arith.constant 0 : index
    %c0_25 = arith.constant 0 : index
    %40 = vector.load %arg3[%c1_23, %c0_24, %c0_25] : memref<3x128x128xbf16, #tpu.memory_space<vmem>>, vector<1x128x128xbf16>
    %41 = vector.shape_cast %40 : vector<1x128x128xbf16> to vector<128x128xbf16>
    %cst_26 = arith.constant dense<0.000000e+00> : vector<16x128xf32>
    %42 = tpu.matmul %39, %41, %cst_26 {dimension_numbers = #tpu.dot_dimension_numbers<[1], [0], [0], [1], [0, 0, 1, 1], [], []>} : vector<16x128xbf16>, vector<128x128xbf16>, vector<16x128xf32> -> vector<16x128xf32>
    %43 = arith.addf %37, %42 : vector<16x128xf32>
    %44 = vector.extract_strided_slice %30 {offsets = [2, 0], sizes = [16, 128], strides = [1, 1]} : vector<18x128xf32> to vector<16x128xf32>
    %45 = arith.truncf %44 : vector<16x128xf32> to vector<16x128xbf16>
    %c2_27 = arith.constant 2 : index
    %c0_28 = arith.constant 0 : index
    %c0_29 = arith.constant 0 : index
    %46 = vector.load %arg3[%c2_27, %c0_28, %c0_29] : memref<3x128x128xbf16, #tpu.memory_space<vmem>>, vector<1x128x128xbf16>
    %47 = vector.shape_cast %46 : vector<1x128x128xbf16> to vector<128x128xbf16>
    %cst_30 = arith.constant dense<0.000000e+00> : vector<16x128xf32>
    %48 = tpu.matmul %45, %47, %cst_30 {dimension_numbers = #tpu.dot_dimension_numbers<[1], [0], [0], [1], [0, 0, 1, 1], [], []>} : vector<16x128xbf16>, vector<128x128xbf16>, vector<16x128xf32> -> vector<16x128xf32>
    %49 = arith.addf %43, %48 : vector<16x128xf32>
    %c0_31 = arith.constant 0 : index
    %c0_32 = arith.constant 0 : index
    %50 = vector.load %arg6[%c0_31, %c0_32] : memref<1x128xf32, #tpu.memory_space<vmem>>, vector<1x128xf32>
    %51 = vector.broadcast %50 : vector<1x128xf32> to vector<16x128xf32>
    %52 = arith.mulf %49, %51 : vector<16x128xf32>
    %c0_33 = arith.constant 0 : index
    %c0_34 = arith.constant 0 : index
    %53 = vector.load %arg7[%c0_33, %c0_34] : memref<1x128xf32, #tpu.memory_space<vmem>>, vector<1x128xf32>
    %54 = vector.broadcast %53 : vector<1x128xf32> to vector<16x128xf32>
    %55 = arith.addf %52, %54 : vector<16x128xf32>
    %56 = vector.extract_strided_slice %1 {offsets = [1, 0], sizes = [16, 128], strides = [1, 1]} : vector<18x128xf32> to vector<16x128xf32>
    %cst_35 = arith.constant 0.000000e+00 : f32
    %57 = vector.broadcast %cst_35 : f32 to vector<16x128xf32>
    %58 = arith.maximumf %55, %57 : vector<16x128xf32>
    %59 = arith.addf %56, %58 : vector<16x128xf32>
    %c0_36 = arith.constant 0 : index
    %c0_37 = arith.constant 0 : index
    %c0_38 = arith.constant 0 : index
    %60 = vector.load %arg8[%c0_36, %c0_37, %c0_38] : memref<1x16x128xf32, #tpu.memory_space<vmem>>, vector<1x16x128xf32>
    %61 = vector.shape_cast %60 : vector<1x16x128xf32> to vector<16x128xf32>
    %62 = vector.shape_cast %59 : vector<16x128xf32> to vector<1x16x128xf32>
    tpu.vector_store %arg8[%c0_36, %c0_37, %c0_38], %62 {strides = array<i32>} : memref<1x16x128xf32, #tpu.memory_space<vmem>>, vector<1x16x128xf32>,
    return
  }
  func.func @transform_0(%arg0: i32) -> (i32, i32, i32) {
    %c0_i32 = arith.constant 0 : i32
    %c0_i32_0 = arith.constant 0 : i32
    %c0_i32_1 = arith.constant 0 : i32
    return %arg0, %c0_i32, %c0_i32_0 : i32, i32, i32
  }
  func.func @transform_1(%arg0: i32) -> (i32, i32, i32) {
    %c0_i32 = arith.constant 0 : i32
    %c0_i32_0 = arith.constant 0 : i32
    %c0_i32_1 = arith.constant 0 : i32
    %c0_i32_2 = arith.constant 0 : i32
    return %c0_i32, %c0_i32_0, %c0_i32_1 : i32, i32, i32
  }
  func.func @transform_2(%arg0: i32) -> (i32, i32, i32) {
    %c0_i32 = arith.constant 0 : i32
    %c0_i32_0 = arith.constant 0 : i32
    %c0_i32_1 = arith.constant 0 : i32
    %c0_i32_2 = arith.constant 0 : i32
    return %c0_i32, %c0_i32_0, %c0_i32_1 : i32, i32, i32
  }
  func.func @transform_3(%arg0: i32) -> (i32, i32) {
    %c0_i32 = arith.constant 0 : i32
    %c0_i32_0 = arith.constant 0 : i32
    %c0_i32_1 = arith.constant 0 : i32
    return %c0_i32, %c0_i32_0 : i32, i32
  }
  func.func @transform_4(%arg0: i32) -> (i32, i32) {
    %c0_i32 = arith.constant 0 : i32
    %c0_i32_0 = arith.constant 0 : i32
    %c0_i32_1 = arith.constant 0 : i32
    return %c0_i32, %c0_i32_0 : i32, i32
  }
  func.func @transform_5(%arg0: i32) -> (i32, i32) {
    %c0_i32 = arith.constant 0 : i32
    %c0_i32_0 = arith.constant 0 : i32
    %c0_i32_1 = arith.constant 0 : i32
    return %c0_i32, %c0_i32_0 : i32, i32
  }
  func.func @transform_6(%arg0: i32) -> (i32, i32) {
    %c0_i32 = arith.constant 0 : i32
    %c0_i32_0 = arith.constant 0 : i32
    %c0_i32_1 = arith.constant 0 : i32
    return %c0_i32, %c0_i32_0 : i32, i32
  }
  func.func @transform_7(%arg0: i32) -> (i32, i32, i32) {
    %c0_i32 = arith.constant 0 : i32
    %c0_i32_0 = arith.constant 0 : i32
    %c0_i32_1 = arith.constant 0 : i32
    return %arg0, %c0_i32, %c0_i32_0 : i32, i32, i32
  }
}

</mosaic_0001>

<llo_original>
// kernel: tpu_custom_call.1
$region0: #{tpu_custom_call.1}
  #allocation0 [shape = 'u32[]', space=smem, size = 0x4, offset = 0x4, fixed_abs, tag = 'smem constant byte address 0x4 - core index']
  #allocation1 [shape = 'u32[144,128]{1,0:T(1,128)}', space=vmem, size = 0x12000, scoped, tag = 'internal scratch']
  %s0 = inlined_call_operand.vmem [shape: f32[2,18,128], index: 0, kind: input, shape index: {}]
  %s1 = inlined_call_operand.hbm [shape: bf16[3,128,128], index: 1, kind: input, shape index: {}]
  %s2 = inlined_call_operand.hbm [shape: bf16[3,128,128], index: 2, kind: input, shape index: {}]
  %s3 = inlined_call_operand.vmem [shape: f32[1,128], index: 3, kind: input, shape index: {}]
  %s4 = inlined_call_operand.vmem [shape: f32[1,128], index: 4, kind: input, shape index: {}]
  %s5 = inlined_call_operand.vmem [shape: f32[1,128], index: 5, kind: input, shape index: {}]
  %s6 = inlined_call_operand.vmem [shape: f32[1,128], index: 6, kind: input, shape index: {}]
  %s7 = inlined_call_operand.hbm [shape: f32[2,16,128], index: 7, kind: output, shape index: {}]
  %s8 = sld [smem:[#allocation0]]
  $region69: #{tpu_custom_call.1} parent=0
    _
  %s10 = ssub.s32 1, %s8
  %s11 = scalar_select 0, %s10, %s8
  $region1: #{tpu_custom_call.1} parent=0
    #allocation2 [shape = 'u8[98304]{0}', space=vmem, size = 0x18000, scoped, tag = 'input window, operand 1, single buffered']
    #allocation3 [shape = 's32[2]{0}', space=sflag, size = 0x8, scoped, tag = 'scoped memory for tpu_custom_call.1']
    #allocation4 [shape = 's32[2]{0}', space=sflag, size = 0x8, scoped, tag = 'scoped memory for tpu_custom_call.1']
    #allocation5 [shape = 'u8[98304]{0}', space=vmem, size = 0x18000, scoped, tag = 'input window, operand 2, single buffered']
    #allocation6 [shape = 's32[1]{0}', space=sflag, size = 0x4, scoped, tag = 'scoped memory for tpu_custom_call.1']
    #allocation7 [shape = 'u8[16384]{0}', space=vmem, size = 0x4000, scoped, tag = 'output window, operand 0']
    %12 = vsyncpa [#allocation3], 0
    %13 = vsyncpa [#allocation6], 0
    %14 = vsyncpa [#allocation4], 0
    %s15 = scalar_lea.sflag [#allocation4], 1
    %16 = vsyncpa %s15, 0
    loop: start=0, step=1, limit=4
    $region2: #{tpu_custom_call.1} parent=1 // loop_pre_header
      _
    $region3: #{tpu_custom_call.1} parent=1 // loop_header
      %s18 = sphi 0, %s22
      %p19 = scmp.ge.s32.totalorder %s18, 4
      %s28 = sphi 0, %s30
      %s31 = sphi 0, %s28
      %s32 = sphi 0, %s31
      %s48 = sphi 0, %s32
      %s52 = sphi 0, %s52
      %s54 = sphi 0, %s52
      %s55 = sphi 0, %s54
      %s69 = sphi 0, %s55
      %s73 = sphi 0, %s73
      %s75 = sphi 0, %s73
      %s76 = sphi 0, %s75
      %s90 = sphi 0, %s76
      %s94 = sphi 0, %s94
      %s96 = sphi 0, %s94
      %s97 = sphi 0, %s96
      %s111 = sphi 0, %s97
      %s115 = sphi 0, %s115
      %s117 = sphi 0, %s115
      %s118 = sphi 0, %s117
      %s132 = sphi 0, %s118
      %s136 = sphi 0, %s136
      %s138 = sphi 0, %s136
      %s139 = sphi 0, %s138
      %s153 = sphi 0, %s139
      %s157 = sphi 0, %s157
      %s159 = sphi 0, %s157
      %s160 = sphi 0, %s159
      %s174 = sphi 0, %s160
      %s180 = sphi 0, %s182
      %s183 = sphi 0, %s180
      %s184 = sphi 0, %s183
      %s200 = sphi 0, %s184
    $region4: #{tpu_custom_call.1} parent=1 // loop_header_branch
      %21 = sbr.rel (%p19) target = $region8
    $region5: #{tpu_custom_call.1} parent=1 // loop_body
      %s23 = ssub.s32 %s18, 1
      %s24 = ssub.s32 %s18, 2
      %s25 = sadd.s32 %s18, 1
      %s26 = ssub.s32 %s18, %s25
      %p27 = scmp.eq.s32.totalorder %s26, 0
      %s29 = sadd.s32 %s28, 1
      %s30 = scalar_select %p27, %s28, %s29
      %p33 = pneg %p27
      %p34 = scmp.eq.s32.totalorder %s18, 1
      %p35 = por %p33, %p34
      %p36 = scmp.ne.s32.totalorder %s28, %s31
      %p37 = scmp.eq.s32.totalorder %s18, 0
      %p38 = por %p36, %p37
      %p39 = scmp.ne.s32.totalorder %s28, %s31
      %p40 = scmp.eq.s32.totalorder %s23, 1
      %p41 = por %p39, %p40
      %p42 = scmp.ne.s32.totalorder %s31, %s32
      %p43 = scmp.eq.s32.totalorder %s23, 0
      %p44 = por %p42, %p43
      %p45 = scmp.ne.s32.totalorder %s31, %s32
      %p46 = scmp.eq.s32.totalorder %s24, 1
      %p47 = por %p45, %p46
      %p49 = scmp.ne.s32.totalorder %s32, %s48
      %p50 = scmp.eq.s32.totalorder %s24, 0
      %p51 = por %p49, %p50
      %s53 = sadd.s32 %s52, 1
      %p56 = scmp.eq.s32.totalorder %s18, 1
      %p57 = scmp.ne.s32.totalorder %s52, %s54
      %p58 = scmp.eq.s32.totalorder %s18, 0
      %p59 = por %p57, %p58
      %p60 = scmp.ne.s32.totalorder %s52, %s54
      %p61 = scmp.eq.s32.totalorder %s23, 1
      %p62 = por %p60, %p61
      %p63 = scmp.ne.s32.totalorder %s54, %s55
      %p64 = scmp.eq.s32.totalorder %s23, 0
      %p65 = por %p63, %p64
      %p66 = scmp.ne.s32.totalorder %s54, %s55
      %p67 = scmp.eq.s32.totalorder %s24, 1
      %p68 = por %p66, %p67
      %p70 = scmp.ne.s32.totalorder %s55, %s69
      %p71 = scmp.eq.s32.totalorder %s24, 0
      %p72 = por %p70, %p71
      %s74 = sadd.s32 %s73, 1
      %p77 = scmp.eq.s32.totalorder %s18, 1
      %p78 = scmp.ne.s32.totalorder %s73, %s75
      %p79 = scmp.eq.s32.totalorder %s18, 0
      %p80 = por %p78, %p79
      %p81 = scmp.ne.s32.totalorder %s73, %s75
      %p82 = scmp.eq.s32.totalorder %s23, 1
      %p83 = por %p81, %p82
      %p84 = scmp.ne.s32.totalorder %s75, %s76
      %p85 = scmp.eq.s32.totalorder %s23, 0
      %p86 = por %p84, %p85
      %p87 = scmp.ne.s32.totalorder %s75, %s76
      %p88 = scmp.eq.s32.totalorder %s24, 1
      %p89 = por %p87, %p88
      %p91 = scmp.ne.s32.totalorder %s76, %s90
      %p92 = scmp.eq.s32.totalorder %s24, 0
      %p93 = por %p91, %p92
      %s95 = sadd.s32 %s94, 1
      %p98 = scmp.eq.s32.totalorder %s18, 1
      %p99 = scmp.ne.s32.totalorder %s94, %s96
      %p100 = scmp.eq.s32.totalorder %s18, 0
      %p101 = por %p99, %p100
      %p102 = scmp.ne.s32.totalorder %s94, %s96
      %p103 = scmp.eq.s32.totalorder %s23, 1
      %p104 = por %p102, %p103
      %p105 = scmp.ne.s32.totalorder %s96, %s97
      %p106 = scmp.eq.s32.totalorder %s23, 0
      %p107 = por %p105, %p106
      %p108 = scmp.ne.s32.totalorder %s96, %s97
      %p109 = scmp.eq.s32.totalorder %s24, 1
      %p110 = por %p108, %p109
      %p112 = scmp.ne.s32.totalorder %s97, %s111
      %p113 = scmp.eq.s32.totalorder %s24, 0
      %p114 = por %p112, %p113
      %s116 = sadd.s32 %s115, 1
      %p119 = scmp.eq.s32.totalorder %s18, 1
      %p120 = scmp.ne.s32.totalorder %s115, %s117
      %p121 = scmp.eq.s32.totalorder %s18, 0
      %p122 = por %p120, %p121
      %p123 = scmp.ne.s32.totalorder %s115, %s117
      %p124 = scmp.eq.s32.totalorder %s23, 1
      %p125 = por %p123, %p124
      %p126 = scmp.ne.s32.totalorder %s117, %s118
      %p127 = scmp.eq.s32.totalorder %s23, 0
      %p128 = por %p126, %p127
      %p129 = scmp.ne.s32.totalorder %s117, %s118
      %p130 = scmp.eq.s32.totalorder %s24, 1
      %p131 = por %p129, %p130
      %p133 = scmp.ne.s32.totalorder %s118, %s132
      %p134 = scmp.eq.s32.totalorder %s24, 0
      %p135 = por %p133, %p134
      %s137 = sadd.s32 %s136, 1
      %p140 = scmp.eq.s32.totalorder %s18, 1
      %p141 = scmp.ne.s32.totalorder %s136, %s138
      %p142 = scmp.eq.s32.totalorder %s18, 0
      %p143 = por %p141, %p142
      %p144 = scmp.ne.s32.totalorder %s136, %s138
      %p145 = scmp.eq.s32.totalorder %s23, 1
      %p146 = por %p144, %p145
      %p147 = scmp.ne.s32.totalorder %s138, %s139
      %p148 = scmp.eq.s32.totalorder %s23, 0
      %p149 = por %p147, %p148
      %p150 = scmp.ne.s32.totalorder %s138, %s139
      %p151 = scmp.eq.s32.totalorder %s24, 1
      %p152 = por %p150, %p151
      %p154 = scmp.ne.s32.totalorder %s139, %s153
      %p155 = scmp.eq.s32.totalorder %s24, 0
      %p156 = por %p154, %p155
      %s158 = sadd.s32 %s157, 1
      %p161 = scmp.eq.s32.totalorder %s18, 1
      %p162 = scmp.ne.s32.totalorder %s157, %s159
      %p163 = scmp.eq.s32.totalorder %s18, 0
      %p164 = por %p162, %p163
      %p165 = scmp.ne.s32.totalorder %s157, %s159
      %p166 = scmp.eq.s32.totalorder %s23, 1
      %p167 = por %p165, %p166
      %p168 = scmp.ne.s32.totalorder %s159, %s160
      %p169 = scmp.eq.s32.totalorder %s23, 0
      %p170 = por %p168, %p169
      %p171 = scmp.ne.s32.totalorder %s159, %s160
      %p172 = scmp.eq.s32.totalorder %s24, 1
      %p173 = por %p171, %p172
      %p175 = scmp.ne.s32.totalorder %s160, %s174
      %p176 = scmp.eq.s32.totalorder %s24, 0
      %p177 = por %p175, %p176
      %s178 = ssub.s32 %s18, %s25
      %p179 = scmp.eq.s32.totalorder %s178, 0
      %s181 = sadd.s32 %s180, 1
      %s182 = scalar_select %p179, %s180, %s181
      %p185 = pneg %p179
      %p186 = scmp.eq.s32.totalorder %s18, 1
      %p187 = por %p185, %p186
      %p188 = scmp.ne.s32.totalorder %s180, %s183
      %p189 = scmp.eq.s32.totalorder %s18, 0
      %p190 = por %p188, %p189
      %p191 = scmp.ne.s32.totalorder %s180, %s183
      %p192 = scmp.eq.s32.totalorder %s23, 1
      %p193 = por %p191, %p192
      %p194 = scmp.ne.s32.totalorder %s183, %s184
      %p195 = scmp.eq.s32.totalorder %s23, 0
      %p196 = por %p194, %p195
      %p197 = scmp.ne.s32.totalorder %s183, %s184
      %p198 = scmp.eq.s32.totalorder %s24, 1
      %p199 = por %p197, %p198
      %p201 = scmp.ne.s32.totalorder %s184, %s200
      %p202 = scmp.eq.s32.totalorder %s24, 0
      %p203 = por %p201, %p202
      %p204 = scmp.le.s32.totalorder 1, %s18
      %p205 = scmp.lt.s32.totalorder %s18, 3
      %p206 = pnand %p204, %p205
      %p207 = pneg %p206
      // Predicated region
      $region9: #{tpu_custom_call.1} parent=5 // pred_check
        _
      $region10: #{tpu_custom_call.1} parent=5 // pred_check_branch
        %209 = sbr.rel (%p206) target = $region12
      $region11: #{tpu_custom_call.1} parent=5 // pred_region
        %s210 = ssub.s32 %s18, 1
        // Predicated region
        $region13: #{tpu_custom_call.1} parent=11 // pred_check
          %p211 = pneg %p65
        $region14: #{tpu_custom_call.1} parent=11 // pred_check_branch
          %213 = sbr.rel (%p211) target = $region16
        $region15: #{tpu_custom_call.1} parent=11 // pred_region
          %s215 = ssub.s32 3072, 3072
          %216 = vsyncadd [#allocation3], %s215
          %s217 = sshll.u32 [#allocation2], 4
          %s218 = int_to_ptr.vmem [resolvable:$true] %s217
          %223 = dma.hbm_to_vmem [thread:$0]  %s1, 3072, %s218, [#allocation3], 64, 64, 4
        $region16: #{tpu_custom_call.1} parent=11 // pred_fallthru
          _
        // Predicated region
        $region17: #{tpu_custom_call.1} parent=11 // pred_check
          %p224 = pneg %p86
        $region18: #{tpu_custom_call.1} parent=11 // pred_check_branch
          %226 = sbr.rel (%p224) target = $region20
        $region19: #{tpu_custom_call.1} parent=11 // pred_region
          %s228 = ssub.s32 3072, 3072
          %229 = vsyncadd [#allocation6], %s228
          %s230 = sshll.u32 [#allocation5], 4
          %s231 = int_to_ptr.vmem [resolvable:$true] %s230
          %236 = dma.hbm_to_vmem [thread:$0]  %s2, 3072, %s231, [#allocation6], 64, 64, 4
        $region20: #{tpu_custom_call.1} parent=11 // pred_fallthru
          _
        // Predicated region
        $region21: #{tpu_custom_call.1} parent=11 // pred_check
          %p237 = pneg %p107
        $region22: #{tpu_custom_call.1} parent=11 // pred_check_branch
          %239 = sbr.rel (%p237) target = $region24
        $region23: #{tpu_custom_call.1} parent=11 // pred_region
          _
        $region24: #{tpu_custom_call.1} parent=11 // pred_fallthru
          _
        // Predicated region
        $region25: #{tpu_custom_call.1} parent=11 // pred_check
          %p240 = pneg %p128
        $region26: #{tpu_custom_call.1} parent=11 // pred_check_branch
          %242 = sbr.rel (%p240) target = $region28
        $region27: #{tpu_custom_call.1} parent=11 // pred_region
          _
        $region28: #{tpu_custom_call.1} parent=11 // pred_fallthru
          _
        // Predicated region
        $region29: #{tpu_custom_call.1} parent=11 // pred_check
          %p243 = pneg %p149
        $region30: #{tpu_custom_call.1} parent=11 // pred_check_branch
          %245 = sbr.rel (%p243) target = $region32
        $region31: #{tpu_custom_call.1} parent=11 // pred_region
          _
        $region32: #{tpu_custom_call.1} parent=11 // pred_fallthru
          _
        // Predicated region
        $region33: #{tpu_custom_call.1} parent=11 // pred_check
          %p246 = pneg %p170
        $region34: #{tpu_custom_call.1} parent=11 // pred_check_branch
          %248 = sbr.rel (%p246) target = $region36
        $region35: #{tpu_custom_call.1} parent=11 // pred_region
          _
        $region36: #{tpu_custom_call.1} parent=11 // pred_fallthru
          _
      $region12: #{tpu_custom_call.1} parent=5 // pred_fallthru
        _
      %p249 = scmp.lt.s32.totalorder %s18, 2
      // Predicated region
      $region37: #{tpu_custom_call.1} parent=5 // pred_check
        %p250 = pneg %p249
      $region38: #{tpu_custom_call.1} parent=5 // pred_check_branch
        %252 = sbr.rel (%p250) target = $region40
      $region39: #{tpu_custom_call.1} parent=5 // pred_region
        // Predicated region
        $region41: #{tpu_custom_call.1} parent=39 // pred_check
          %p253 = pneg %p38
        $region42: #{tpu_custom_call.1} parent=39 // pred_check_branch
          %255 = sbr.rel (%p253) target = $region44
        $region43: #{tpu_custom_call.1} parent=39 // pred_region
          %p256 = scmp.lt.s32.totalorder %s18, 1
          %s257 = scalar_select %p256, %s18, 1
          %s258 = smul.addr %s257, 3
          %s259 = smul.addr %s258, 8
          %s260 = scalar_lea.vmem %s0, %s259
        $region44: #{tpu_custom_call.1} parent=39 // pred_fallthru
          _
      $region40: #{tpu_custom_call.1} parent=5 // pred_fallthru
        _
      %p261 = scmp.le.s32.totalorder 1, %s18
      %p262 = scmp.lt.s32.totalorder %s18, 3
      %p263 = pnand %p261, %p262
      %p264 = pneg %p263
      // Predicated region
      $region45: #{tpu_custom_call.1} parent=5 // pred_check
        _
      $region46: #{tpu_custom_call.1} parent=5 // pred_check_branch
        %266 = sbr.rel (%p263) target = $region48
      $region47: #{tpu_custom_call.1} parent=5 // pred_region
        %s267 = ssub.s32 %s18, 1
        // Predicated region
        $region49: #{tpu_custom_call.1} parent=47 // pred_check
          %p268 = pneg %p65
        $region50: #{tpu_custom_call.1} parent=47 // pred_check_branch
          %270 = sbr.rel (%p268) target = $region52
        $region51: #{tpu_custom_call.1} parent=47 // pred_region
          %271 = dma.done [#allocation3], 3072
        $region52: #{tpu_custom_call.1} parent=47 // pred_fallthru
          _
        // Predicated region
        $region53: #{tpu_custom_call.1} parent=47 // pred_check
          %p272 = pneg %p86
        $region54: #{tpu_custom_call.1} parent=47 // pred_check_branch
          %274 = sbr.rel (%p272) target = $region56
        $region55: #{tpu_custom_call.1} parent=47 // pred_region
          %275 = dma.done [#allocation6], 3072
        $region56: #{tpu_custom_call.1} parent=47 // pred_fallthru
          _
        %p276 = scmp.lt.s32.totalorder %s23, 1
        %s277 = scalar_select %p276, %s23, 1
        %s278 = smul.addr %s277, 3
        %s279 = smul.addr %s278, 8
        %s280 = scalar_lea.vmem %s0, %s279
        %p281 = pneg %p44
        %p282 = pneg %p41
        %p283 = pneg %p65
        %p284 = pneg %p62
        %p285 = pneg %p86
        %p286 = pneg %p83
        %p287 = pneg %p107
        %p288 = pneg %p104
        %p289 = pneg %p128
        %p290 = pneg %p125
        %p291 = pneg %p149
        %p292 = pneg %p146
        %p293 = pneg %p170
        %p294 = pneg %p167
        %p295 = pneg %p196
        %p296 = pneg %p193
        %s297 = sand.u32 %s183, 1
        %s298 = scalar_lea.sflag [#allocation4], %s297
        %s299 = sand.u32 %s183, 1
        %s300 = smul.addr %s299, 16
        %s301 = scalar_lea.vmem [#allocation7], %s300
        %p302 = scmp.lt.s32.totalorder %s23, 1
        %s303 = scalar_select %p302, %s23, 1
        %s304 = smul.addr %s303, 3
        %s305 = smul.addr %s304, 8
        %s306 = scalar_lea.vmem %s0, %s305
        %v308 = vld [vmem:[%s306] sm:$0xff]
        %v309 = vld [vmem:[%s306 + $0x8] sm:$0xff]
        %v310 = vld [vmem:[%s306 + $0x10] sm:$0x3]
        %v311 = vpack.c.bf16 %v309, %v308
        %v312 = vld [vmem:[#allocation2] sm:$0xf]
        %v313 = vld [vmem:[#allocation2 + $0x4] sm:$0xf]
        %v314 = vld [vmem:[#allocation2 + $0x8] sm:$0xf]
        %v315 = vld [vmem:[#allocation2 + $0xc] sm:$0xf]
        %v316 = vld [vmem:[#allocation2 + $0x10] sm:$0xf]
        %v317 = vld [vmem:[#allocation2 + $0x14] sm:$0xf]
        %v318 = vld [vmem:[#allocation2 + $0x18] sm:$0xf]
        %v319 = vld [vmem:[#allocation2 + $0x1c] sm:$0xf]
        %v320 = vld [vmem:[#allocation2 + $0x20] sm:$0xf]
        %v321 = vld [vmem:[#allocation2 + $0x24] sm:$0xf]
        %v322 = vld [vmem:[#allocation2 + $0x28] sm:$0xf]
        %v323 = vld [vmem:[#allocation2 + $0x2c] sm:$0xf]
        %v324 = vld [vmem:[#allocation2 + $0x30] sm:$0xf]
        %v325 = vld [vmem:[#allocation2 + $0x34] sm:$0xf]
        %v326 = vld [vmem:[#allocation2 + $0x38] sm:$0xf]
        %v327 = vld [vmem:[#allocation2 + $0x3c] sm:$0xf]
        %v328 = vpack.c.bf16 %v310, %v310
        %s329 = scalar_lea.vmem [#allocation2], 64
        %v330 = vld [vmem:[%s329] sm:$0xf]
        %v331 = vld [vmem:[%s329 + $0x4] sm:$0xf]
        %v332 = vld [vmem:[%s329 + $0x8] sm:$0xf]
        %v333 = vld [vmem:[%s329 + $0xc] sm:$0xf]
        %v334 = vld [vmem:[%s329 + $0x10] sm:$0xf]
        %v335 = vld [vmem:[%s329 + $0x14] sm:$0xf]
        %v336 = vld [vmem:[%s329 + $0x18] sm:$0xf]
        %v337 = vld [vmem:[%s329 + $0x1c] sm:$0xf]
        %v338 = vld [vmem:[%s329 + $0x20] sm:$0xf]
        %v339 = vld [vmem:[%s329 + $0x24] sm:$0xf]
        %v340 = vld [vmem:[%s329 + $0x28] sm:$0xf]
        %v341 = vld [vmem:[%s329 + $0x2c] sm:$0xf]
        %v342 = vld [vmem:[%s329 + $0x30] sm:$0xf]
        %v343 = vld [vmem:[%s329 + $0x34] sm:$0xf]
        %v344 = vld [vmem:[%s329 + $0x38] sm:$0xf]
        %v345 = vld [vmem:[%s329 + $0x3c] sm:$0xf]
        %vm346 = vsmask.f32 7424
        %v348 = vshrl.u32 %v311, 16
        %v350 = vshll.u32 %v311, 16
        %v352 = vrot.slane %v350, 1
        %v353 = vor.u32 %v348, %v352
        %v355 = vshll.u32 %v328, 16
        %v357 = vrot.slane %v355, 1
        %v358 = vsel %vm346, %v353, %v357
        %v376 = vunpack.c.l.b16 %v330
        %v377 = vunpack.c.l.b16 %v331
        %v378 = vunpack.c.l.b16 %v332
        %v379 = vunpack.c.l.b16 %v333
        %v380 = vunpack.c.l.b16 %v334
        %v381 = vunpack.c.l.b16 %v335
        %v382 = vunpack.c.l.b16 %v336
        %v383 = vunpack.c.l.b16 %v337
        %v384 = vunpack.c.l.b16 %v338
        %v385 = vunpack.c.l.b16 %v339
        %v386 = vunpack.c.l.b16 %v340
        %v387 = vunpack.c.l.b16 %v341
        %v388 = vunpack.c.l.b16 %v342
        %v389 = vunpack.c.l.b16 %v343
        %v390 = vunpack.c.l.b16 %v344
        %v391 = vunpack.c.l.b16 %v345
        %v392 = vpack.c.b16 %v377, %v376
        %v393 = vpack.c.b16 %v379, %v378
        %v394 = vpack.c.b16 %v381, %v380
        %v395 = vpack.c.b16 %v383, %v382
        %v396 = vpack.c.b16 %v385, %v384
        %v397 = vpack.c.b16 %v387, %v386
        %v398 = vpack.c.b16 %v389, %v388
        %v399 = vpack.c.b16 %v391, %v390
        %408 = vmatprep.subr.bf16.mxu0 0
        %409 = vmatpush1.bf16.msra.mxu0 %v392
        %410 = vmatprep.subr.bf16.mxu0 0
        %411 = vmatpush1.bf16.msra.mxu0 %v393
        %412 = vmatprep.subr.bf16.mxu0 0
        %413 = vmatpush1.bf16.msra.mxu0 %v394
        %414 = vmatprep.subr.bf16.mxu0 0
        %415 = vmatpush1.bf16.msra.mxu0 %v395
        %416 = vmatprep.subr.bf16.mxu0 0
        %417 = vmatpush1.bf16.msra.mxu0 %v396
        %418 = vmatprep.subr.bf16.mxu0 0
        %419 = vmatpush1.bf16.msra.mxu0 %v397
        %420 = vmatprep.subr.bf16.mxu0 0
        %421 = vmatpush1.bf16.msra.mxu0 %v398
        %422 = vmatprep.subr.bf16.mxu0 0
        %423 = vmatpush1.bf16.msra.mxu0 %v399
        %424 = vmatprep.subr.bf16.mxu0 0
        %425 = vmatpush1.bf16.msra.mxu0 0
        %426 = vmatprep.subr.bf16.mxu0 0
        %427 = vmatpush1.bf16.msra.mxu0 0
        %428 = vmatprep.subr.bf16.mxu0 0
        %429 = vmatpush1.bf16.msra.mxu0 0
        %430 = vmatprep.subr.bf16.mxu0 0
        %431 = vmatpush1.bf16.msra.mxu0 0
        %432 = vmatprep.subr.bf16.mxu0 0
        %433 = vmatpush1.bf16.msra.mxu0 0
        %434 = vmatprep.subr.bf16.mxu0 0
        %435 = vmatpush1.bf16.msra.mxu0 0
        %436 = vmatprep.subr.bf16.mxu0 0
        %437 = vmatpush1.bf16.msra.mxu0 0
        %438 = vmatprep.subr.bf16.mxu0 0
        %439 = vmatpush1.bf16.msra.mxu0 0
        %440 = vmatprep.mubr.bf16.mxu0 0
        %441 = vmatmul.mubr.bf16.gmra.mrb[0].mxu0 %v358
        %v442 = vpop.f32.mrb[0].mxu0
        %v443 = vadd.f32 0.0, %v442
        %v444 = vpop.f32.mrb[0].mxu0
        %v445 = vpop.f32.mrb[0].mxu0
        %v446 = vadd.f32 0.0, %v445
        %v447 = vpop.f32.mrb[0].mxu0
        %448 = vdwg.mxu0
        %v465 = vunpack.c.l.b16 %v312
        %v466 = vunpack.c.l.b16 %v313
        %v467 = vunpack.c.l.b16 %v314
        %v468 = vunpack.c.l.b16 %v315
        %v469 = vunpack.c.l.b16 %v316
        %v470 = vunpack.c.l.b16 %v317
        %v471 = vunpack.c.l.b16 %v318
        %v472 = vunpack.c.l.b16 %v319
        %v473 = vunpack.c.l.b16 %v320
        %v474 = vunpack.c.l.b16 %v321
        %v475 = vunpack.c.l.b16 %v322
        %v476 = vunpack.c.l.b16 %v323
        %v477 = vunpack.c.l.b16 %v324
        %v478 = vunpack.c.l.b16 %v325
        %v479 = vunpack.c.l.b16 %v326
        %v480 = vunpack.c.l.b16 %v327
        %v481 = vpack.c.b16 %v466, %v465
        %v482 = vpack.c.b16 %v468, %v467
        %v483 = vpack.c.b16 %v470, %v469
        %v484 = vpack.c.b16 %v472, %v471
        %v485 = vpack.c.b16 %v474, %v473
        %v486 = vpack.c.b16 %v476, %v475
        %v487 = vpack.c.b16 %v478, %v477
        %v488 = vpack.c.b16 %v480, %v479
        %497 = vmatprep.subr.bf16.mxu0 0
        %498 = vmatpush1.bf16.msra.mxu0 %v481
        %499 = vmatprep.subr.bf16.mxu0 0
        %500 = vmatpush1.bf16.msra.mxu0 %v482
        %501 = vmatprep.subr.bf16.mxu0 0
        %502 = vmatpush1.bf16.msra.mxu0 %v483
        %503 = vmatprep.subr.bf16.mxu0 0
        %504 = vmatpush1.bf16.msra.mxu0 %v484
        %505 = vmatprep.subr.bf16.mxu0 0
        %506 = vmatpush1.bf16.msra.mxu0 %v485
        %507 = vmatprep.subr.bf16.mxu0 0
        %508 = vmatpush1.bf16.msra.mxu0 %v486
        %509 = vmatprep.subr.bf16.mxu0 0
        %510 = vmatpush1.bf16.msra.mxu0 %v487
        %511 = vmatprep.subr.bf16.mxu0 0
        %512 = vmatpush1.bf16.msra.mxu0 %v488
        %513 = vmatprep.subr.bf16.mxu0 0
        %514 = vmatpush1.bf16.msra.mxu0 0
        %515 = vmatprep.subr.bf16.mxu0 0
        %516 = vmatpush1.bf16.msra.mxu0 0
        %517 = vmatprep.subr.bf16.mxu0 0
        %518 = vmatpush1.bf16.msra.mxu0 0
        %519 = vmatprep.subr.bf16.mxu0 0
        %520 = vmatpush1.bf16.msra.mxu0 0
        %521 = vmatprep.subr.bf16.mxu0 0
        %522 = vmatpush1.bf16.msra.mxu0 0
        %523 = vmatprep.subr.bf16.mxu0 0
        %524 = vmatpush1.bf16.msra.mxu0 0
        %525 = vmatprep.subr.bf16.mxu0 0
        %526 = vmatpush1.bf16.msra.mxu0 0
        %527 = vmatprep.subr.bf16.mxu0 0
        %528 = vmatpush1.bf16.msra.mxu0 0
        %529 = vmatprep.mubr.bf16.mxu0 0
        %530 = vmatmul.mubr.bf16.gmra.mrb[0].mxu0 %v311
        %v531 = vpop.f32.mrb[0].mxu0
        %v532 = vadd.f32 %v443, %v531
        %v533 = vpop.f32.mrb[0].mxu0
        %v534 = vpop.f32.mrb[0].mxu0
        %v535 = vadd.f32 %v446, %v534
        %v536 = vpop.f32.mrb[0].mxu0
        %537 = vdwg.mxu0
        %s538 = scalar_lea.vmem [#allocation2], 128
        %v539 = vld [vmem:[%s538] sm:$0xf]
        %v540 = vld [vmem:[%s538 + $0x4] sm:$0xf]
        %v541 = vld [vmem:[%s538 + $0x8] sm:$0xf]
        %v542 = vld [vmem:[%s538 + $0xc] sm:$0xf]
        %v543 = vld [vmem:[%s538 + $0x10] sm:$0xf]
        %v544 = vld [vmem:[%s538 + $0x14] sm:$0xf]
        %v545 = vld [vmem:[%s538 + $0x18] sm:$0xf]
        %v546 = vld [vmem:[%s538 + $0x1c] sm:$0xf]
        %v547 = vld [vmem:[%s538 + $0x20] sm:$0xf]
        %v548 = vld [vmem:[%s538 + $0x24] sm:$0xf]
        %v549 = vld [vmem:[%s538 + $0x28] sm:$0xf]
        %v550 = vld [vmem:[%s538 + $0x2c] sm:$0xf]
        %v551 = vld [vmem:[%s538 + $0x30] sm:$0xf]
        %v552 = vld [vmem:[%s538 + $0x34] sm:$0xf]
        %v553 = vld [vmem:[%s538 + $0x38] sm:$0xf]
        %v554 = vld [vmem:[%s538 + $0x3c] sm:$0xf]
        %vm557 = vcmask 1046528
        %v558 = vrot.slane %v311, 1
        %v559 = vrot.slane %v328, 1
        %v560 = vsel %vm557, %v558, %v559
        %v578 = vunpack.c.l.b16 %v539
        %v579 = vunpack.c.l.b16 %v540
        %v580 = vunpack.c.l.b16 %v541
        %v581 = vunpack.c.l.b16 %v542
        %v582 = vunpack.c.l.b16 %v543
        %v583 = vunpack.c.l.b16 %v544
        %v584 = vunpack.c.l.b16 %v545
        %v585 = vunpack.c.l.b16 %v546
        %v586 = vunpack.c.l.b16 %v547
        %v587 = vunpack.c.l.b16 %v548
        %v588 = vunpack.c.l.b16 %v549
        %v589 = vunpack.c.l.b16 %v550
        %v590 = vunpack.c.l.b16 %v551
        %v591 = vunpack.c.l.b16 %v552
        %v592 = vunpack.c.l.b16 %v553
        %v593 = vunpack.c.l.b16 %v554
        %v594 = vpack.c.b16 %v579, %v578
        %v595 = vpack.c.b16 %v581, %v580
        %v596 = vpack.c.b16 %v583, %v582
        %v597 = vpack.c.b16 %v585, %v584
        %v598 = vpack.c.b16 %v587, %v586
        %v599 = vpack.c.b16 %v589, %v588
        %v600 = vpack.c.b16 %v591, %v590
        %v601 = vpack.c.b16 %v593, %v592
        %610 = vmatprep.subr.bf16.mxu0 0
        %611 = vmatpush1.bf16.msra.mxu0 %v594
        %612 = vmatprep.subr.bf16.mxu0 0
        %613 = vmatpush1.bf16.msra.mxu0 %v595
        %614 = vmatprep.subr.bf16.mxu0 0
        %615 = vmatpush1.bf16.msra.mxu0 %v596
        %616 = vmatprep.subr.bf16.mxu0 0
        %617 = vmatpush1.bf16.msra.mxu0 %v597
        %618 = vmatprep.subr.bf16.mxu0 0
        %619 = vmatpush1.bf16.msra.mxu0 %v598
        %620 = vmatprep.subr.bf16.mxu0 0
        %621 = vmatpush1.bf16.msra.mxu0 %v599
        %622 = vmatprep.subr.bf16.mxu0 0
        %623 = vmatpush1.bf16.msra.mxu0 %v600
        %624 = vmatprep.subr.bf16.mxu0 0
        %625 = vmatpush1.bf16.msra.mxu0 %v601
        %626 = vmatprep.subr.bf16.mxu0 0
        %627 = vmatpush1.bf16.msra.mxu0 0
        %628 = vmatprep.subr.bf16.mxu0 0
        %629 = vmatpush1.bf16.msra.mxu0 0
        %630 = vmatprep.subr.bf16.mxu0 0
        %631 = vmatpush1.bf16.msra.mxu0 0
        %632 = vmatprep.subr.bf16.mxu0 0
        %633 = vmatpush1.bf16.msra.mxu0 0
        %634 = vmatprep.subr.bf16.mxu0 0
        %635 = vmatpush1.bf16.msra.mxu0 0
        %636 = vmatprep.subr.bf16.mxu0 0
        %637 = vmatpush1.bf16.msra.mxu0 0
        %638 = vmatprep.subr.bf16.mxu0 0
        %639 = vmatpush1.bf16.msra.mxu0 0
        %640 = vmatprep.subr.bf16.mxu0 0
        %641 = vmatpush1.bf16.msra.mxu0 0
        %642 = vmatprep.mubr.bf16.mxu0 0
        %643 = vmatmul.mubr.bf16.gmra.mrb[0].mxu0 %v560
        %v644 = vpop.f32.mrb[0].mxu0
        %v645 = vadd.f32 0.0, %v644
        %v646 = vpop.f32.mrb[0].mxu0
        %v647 = vpop.f32.mrb[0].mxu0
        %v648 = vadd.f32 0.0, %v647
        %v649 = vpop.f32.mrb[0].mxu0
        %650 = vdwg.mxu0
        %v651 = vadd.f32 %v532, %v645
        %v652 = vadd.f32 %v535, %v648
        %v653 = vld [vmem:[%s3] sm:$0x1]
        %v655 = vlaneseq
        %v656 = vshrl.u32 %v655, 7
        %v657 = vsub.s32 0, %v656
        %v658 = vrot.slane %v653, %v657
        %v660 = vmul.f32 %v651, %v658
        %v661 = vmul.f32 %v652, %v658
        %v662 = vld [vmem:[%s4] sm:$0x1]
        %v664 = vlaneseq
        %v665 = vshrl.u32 %v664, 7
        %v666 = vsub.s32 0, %v665
        %v667 = vrot.slane %v662, %v666
        %v669 = vadd.f32 %v660, %v667
        %v670 = vadd.f32 %v661, %v667
        %v671 = vmax.f32 %v669, 0.0
        %v672 = vmax.f32 %v670, 0.0
        %vm675 = vcmask 1040384
        %v676 = vrot.slane %v671, 7
        %v677 = vrot.slane %v672, 7
        %v678 = vsel %vm675, %v676, %v677
        %v682 = vsel %vm675, 0.0, %v676
        %v683 = vsel %vm675, %v677, 0.0
        %v684 = vpack.c.bf16 %v678, %v682
        %v685 = vld [vmem:[#allocation5] sm:$0xf]
        %v686 = vld [vmem:[#allocation5 + $0x4] sm:$0xf]
        %v687 = vld [vmem:[#allocation5 + $0x8] sm:$0xf]
        %v688 = vld [vmem:[#allocation5 + $0xc] sm:$0xf]
        %v689 = vld [vmem:[#allocation5 + $0x10] sm:$0xf]
        %v690 = vld [vmem:[#allocation5 + $0x14] sm:$0xf]
        %v691 = vld [vmem:[#allocation5 + $0x18] sm:$0xf]
        %v692 = vld [vmem:[#allocation5 + $0x1c] sm:$0xf]
        %v693 = vld [vmem:[#allocation5 + $0x20] sm:$0xf]
        %v694 = vld [vmem:[#allocation5 + $0x24] sm:$0xf]
        %v695 = vld [vmem:[#allocation5 + $0x28] sm:$0xf]
        %v696 = vld [vmem:[#allocation5 + $0x2c] sm:$0xf]
        %v697 = vld [vmem:[#allocation5 + $0x30] sm:$0xf]
        %v698 = vld [vmem:[#allocation5 + $0x34] sm:$0xf]
        %v699 = vld [vmem:[#allocation5 + $0x38] sm:$0xf]
        %v700 = vld [vmem:[#allocation5 + $0x3c] sm:$0xf]
        %v701 = vpack.c.bf16 %v683, %v683
        %s702 = scalar_lea.vmem [#allocation5], 64
        %v703 = vld [vmem:[%s702] sm:$0xf]
        %v704 = vld [vmem:[%s702 + $0x4] sm:$0xf]
        %v705 = vld [vmem:[%s702 + $0x8] sm:$0xf]
        %v706 = vld [vmem:[%s702 + $0xc] sm:$0xf]
        %v707 = vld [vmem:[%s702 + $0x10] sm:$0xf]
        %v708 = vld [vmem:[%s702 + $0x14] sm:$0xf]
        %v709 = vld [vmem:[%s702 + $0x18] sm:$0xf]
        %v710 = vld [vmem:[%s702 + $0x1c] sm:$0xf]
        %v711 = vld [vmem:[%s702 + $0x20] sm:$0xf]
        %v712 = vld [vmem:[%s702 + $0x24] sm:$0xf]
        %v713 = vld [vmem:[%s702 + $0x28] sm:$0xf]
        %v714 = vld [vmem:[%s702 + $0x2c] sm:$0xf]
        %v715 = vld [vmem:[%s702 + $0x30] sm:$0xf]
        %v716 = vld [vmem:[%s702 + $0x34] sm:$0xf]
        %v717 = vld [vmem:[%s702 + $0x38] sm:$0xf]
        %v718 = vld [vmem:[%s702 + $0x3c] sm:$0xf]
        %v720 = vshrl.u32 %v684, 16
        %v722 = vshll.u32 %v684, 16
        %v724 = vrot.slane %v722, 1
        %v725 = vor.u32 %v720, %v724
        %v727 = vshll.u32 %v701, 16
        %v729 = vrot.slane %v727, 1
        %v730 = vsel %vm346, %v725, %v729
        %v748 = vunpack.c.l.b16 %v703
        %v749 = vunpack.c.l.b16 %v704
        %v750 = vunpack.c.l.b16 %v705
        %v751 = vunpack.c.l.b16 %v706
        %v752 = vunpack.c.l.b16 %v707
        %v753 = vunpack.c.l.b16 %v708
        %v754 = vunpack.c.l.b16 %v709
        %v755 = vunpack.c.l.b16 %v710
        %v756 = vunpack.c.l.b16 %v711
        %v757 = vunpack.c.l.b16 %v712
        %v758 = vunpack.c.l.b16 %v713
        %v759 = vunpack.c.l.b16 %v714
        %v760 = vunpack.c.l.b16 %v715
        %v761 = vunpack.c.l.b16 %v716
        %v762 = vunpack.c.l.b16 %v717
        %v763 = vunpack.c.l.b16 %v718
        %v764 = vpack.c.b16 %v749, %v748
        %v765 = vpack.c.b16 %v751, %v750
        %v766 = vpack.c.b16 %v753, %v752
        %v767 = vpack.c.b16 %v755, %v754
        %v768 = vpack.c.b16 %v757, %v756
        %v769 = vpack.c.b16 %v759, %v758
        %v770 = vpack.c.b16 %v761, %v760
        %v771 = vpack.c.b16 %v763, %v762
        %780 = vmatprep.subr.bf16.mxu0 0
        %781 = vmatpush1.bf16.msra.mxu0 %v764
        %782 = vmatprep.subr.bf16.mxu0 0
        %783 = vmatpush1.bf16.msra.mxu0 %v765
        %784 = vmatprep.subr.bf16.mxu0 0
        %785 = vmatpush1.bf16.msra.mxu0 %v766
        %786 = vmatprep.subr.bf16.mxu0 0
        %787 = vmatpush1.bf16.msra.mxu0 %v767
        %788 = vmatprep.subr.bf16.mxu0 0
        %789 = vmatpush1.bf16.msra.mxu0 %v768
        %790 = vmatprep.subr.bf16.mxu0 0
        %791 = vmatpush1.bf16.msra.mxu0 %v769
        %792 = vmatprep.subr.bf16.mxu0 0
        %793 = vmatpush1.bf16.msra.mxu0 %v770
        %794 = vmatprep.subr.bf16.mxu0 0
        %795 = vmatpush1.bf16.msra.mxu0 %v771
        %796 = vmatprep.subr.bf16.mxu0 0
        %797 = vmatpush1.bf16.msra.mxu0 0
        %798 = vmatprep.subr.bf16.mxu0 0
        %799 = vmatpush1.bf16.msra.mxu0 0
        %800 = vmatprep.subr.bf16.mxu0 0
        %801 = vmatpush1.bf16.msra.mxu0 0
        %802 = vmatprep.subr.bf16.mxu0 0
        %803 = vmatpush1.bf16.msra.mxu0 0
        %804 = vmatprep.subr.bf16.mxu0 0
        %805 = vmatpush1.bf16.msra.mxu0 0
        %806 = vmatprep.subr.bf16.mxu0 0
        %807 = vmatpush1.bf16.msra.mxu0 0
        %808 = vmatprep.subr.bf16.mxu0 0
        %809 = vmatpush1.bf16.msra.mxu0 0
        %810 = vmatprep.subr.bf16.mxu0 0
        %811 = vmatpush1.bf16.msra.mxu0 0
        %812 = vmatprep.mubr.bf16.mxu0 0
        %813 = vmatmul.mubr.bf16.gmra.mrb[0].mxu0 %v730
        %v814 = vpop.f32.mrb[0].mxu0
        %v815 = vadd.f32 0.0, %v814
        %v816 = vpop.f32.mrb[0].mxu0
        %v817 = vpop.f32.mrb[0].mxu0
        %v818 = vadd.f32 0.0, %v817
        %v819 = vpop.f32.mrb[0].mxu0
        %820 = vdwg.mxu0
        %v837 = vunpack.c.l.b16 %v685
        %v838 = vunpack.c.l.b16 %v686
        %v839 = vunpack.c.l.b16 %v687
        %v840 = vunpack.c.l.b16 %v688
        %v841 = vunpack.c.l.b16 %v689
        %v842 = vunpack.c.l.b16 %v690
        %v843 = vunpack.c.l.b16 %v691
        %v844 = vunpack.c.l.b16 %v692
        %v845 = vunpack.c.l.b16 %v693
        %v846 = vunpack.c.l.b16 %v694
        %v847 = vunpack.c.l.b16 %v695
        %v848 = vunpack.c.l.b16 %v696
        %v849 = vunpack.c.l.b16 %v697
        %v850 = vunpack.c.l.b16 %v698
        %v851 = vunpack.c.l.b16 %v699
        %v852 = vunpack.c.l.b16 %v700
        %v853 = vpack.c.b16 %v838, %v837
        %v854 = vpack.c.b16 %v840, %v839
        %v855 = vpack.c.b16 %v842, %v841
        %v856 = vpack.c.b16 %v844, %v843
        %v857 = vpack.c.b16 %v846, %v845
        %v858 = vpack.c.b16 %v848, %v847
        %v859 = vpack.c.b16 %v850, %v849
        %v860 = vpack.c.b16 %v852, %v851
        %869 = vmatprep.subr.bf16.mxu0 0
        %870 = vmatpush1.bf16.msra.mxu0 %v853
        %871 = vmatprep.subr.bf16.mxu0 0
        %872 = vmatpush1.bf16.msra.mxu0 %v854
        %873 = vmatprep.subr.bf16.mxu0 0
        %874 = vmatpush1.bf16.msra.mxu0 %v855
        %875 = vmatprep.subr.bf16.mxu0 0
        %876 = vmatpush1.bf16.msra.mxu0 %v856
        %877 = vmatprep.subr.bf16.mxu0 0
        %878 = vmatpush1.bf16.msra.mxu0 %v857
        %879 = vmatprep.subr.bf16.mxu0 0
        %880 = vmatpush1.bf16.msra.mxu0 %v858
        %881 = vmatprep.subr.bf16.mxu0 0
        %882 = vmatpush1.bf16.msra.mxu0 %v859
        %883 = vmatprep.subr.bf16.mxu0 0
        %884 = vmatpush1.bf16.msra.mxu0 %v860
        %885 = vmatprep.subr.bf16.mxu0 0
        %886 = vmatpush1.bf16.msra.mxu0 0
        %887 = vmatprep.subr.bf16.mxu0 0
        %888 = vmatpush1.bf16.msra.mxu0 0
        %889 = vmatprep.subr.bf16.mxu0 0
        %890 = vmatpush1.bf16.msra.mxu0 0
        %891 = vmatprep.subr.bf16.mxu0 0
        %892 = vmatpush1.bf16.msra.mxu0 0
        %893 = vmatprep.subr.bf16.mxu0 0
        %894 = vmatpush1.bf16.msra.mxu0 0
        %895 = vmatprep.subr.bf16.mxu0 0
        %896 = vmatpush1.bf16.msra.mxu0 0
        %897 = vmatprep.subr.bf16.mxu0 0
        %898 = vmatpush1.bf16.msra.mxu0 0
        %899 = vmatprep.subr.bf16.mxu0 0
        %900 = vmatpush1.bf16.msra.mxu0 0
        %901 = vmatprep.mubr.bf16.mxu0 0
        %902 = vmatmul.mubr.bf16.gmra.mrb[0].mxu0 %v684
        %v903 = vpop.f32.mrb[0].mxu0
        %v904 = vadd.f32 %v815, %v903
        %v905 = vpop.f32.mrb[0].mxu0
        %v906 = vpop.f32.mrb[0].mxu0
        %v907 = vadd.f32 %v818, %v906
        %v908 = vpop.f32.mrb[0].mxu0
        %909 = vdwg.mxu0
        %s910 = scalar_lea.vmem [#allocation5], 128
        %v911 = vld [vmem:[%s910] sm:$0xf]
        %v912 = vld [vmem:[%s910 + $0x4] sm:$0xf]
        %v913 = vld [vmem:[%s910 + $0x8] sm:$0xf]
        %v914 = vld [vmem:[%s910 + $0xc] sm:$0xf]
        %v915 = vld [vmem:[%s910 + $0x10] sm:$0xf]
        %v916 = vld [vmem:[%s910 + $0x14] sm:$0xf]
        %v917 = vld [vmem:[%s910 + $0x18] sm:$0xf]
        %v918 = vld [vmem:[%s910 + $0x1c] sm:$0xf]
        %v919 = vld [vmem:[%s910 + $0x20] sm:$0xf]
        %v920 = vld [vmem:[%s910 + $0x24] sm:$0xf]
        %v921 = vld [vmem:[%s910 + $0x28] sm:$0xf]
        %v922 = vld [vmem:[%s910 + $0x2c] sm:$0xf]
        %v923 = vld [vmem:[%s910 + $0x30] sm:$0xf]
        %v924 = vld [vmem:[%s910 + $0x34] sm:$0xf]
        %v925 = vld [vmem:[%s910 + $0x38] sm:$0xf]
        %v926 = vld [vmem:[%s910 + $0x3c] sm:$0xf]
        %v929 = vrot.slane %v684, 1
        %v930 = vrot.slane %v701, 1
        %v931 = vsel %vm557, %v929, %v930
        %v949 = vunpack.c.l.b16 %v911
        %v950 = vunpack.c.l.b16 %v912
        %v951 = vunpack.c.l.b16 %v913
        %v952 = vunpack.c.l.b16 %v914
        %v953 = vunpack.c.l.b16 %v915
        %v954 = vunpack.c.l.b16 %v916
        %v955 = vunpack.c.l.b16 %v917
        %v956 = vunpack.c.l.b16 %v918
        %v957 = vunpack.c.l.b16 %v919
        %v958 = vunpack.c.l.b16 %v920
        %v959 = vunpack.c.l.b16 %v921
        %v960 = vunpack.c.l.b16 %v922
        %v961 = vunpack.c.l.b16 %v923
        %v962 = vunpack.c.l.b16 %v924
        %v963 = vunpack.c.l.b16 %v925
        %v964 = vunpack.c.l.b16 %v926
        %v965 = vpack.c.b16 %v950, %v949
        %v966 = vpack.c.b16 %v952, %v951
        %v967 = vpack.c.b16 %v954, %v953
        %v968 = vpack.c.b16 %v956, %v955
        %v969 = vpack.c.b16 %v958, %v957
        %v970 = vpack.c.b16 %v960, %v959
        %v971 = vpack.c.b16 %v962, %v961
        %v972 = vpack.c.b16 %v964, %v963
        %981 = vmatprep.subr.bf16.mxu0 0
        %982 = vmatpush1.bf16.msra.mxu0 %v965
        %983 = vmatprep.subr.bf16.mxu0 0
        %984 = vmatpush1.bf16.msra.mxu0 %v966
        %985 = vmatprep.subr.bf16.mxu0 0
        %986 = vmatpush1.bf16.msra.mxu0 %v967
        %987 = vmatprep.subr.bf16.mxu0 0
        %988 = vmatpush1.bf16.msra.mxu0 %v968
        %989 = vmatprep.subr.bf16.mxu0 0
        %990 = vmatpush1.bf16.msra.mxu0 %v969
        %991 = vmatprep.subr.bf16.mxu0 0
        %992 = vmatpush1.bf16.msra.mxu0 %v970
        %993 = vmatprep.subr.bf16.mxu0 0
        %994 = vmatpush1.bf16.msra.mxu0 %v971
        %995 = vmatprep.subr.bf16.mxu0 0
        %996 = vmatpush1.bf16.msra.mxu0 %v972
        %997 = vmatprep.subr.bf16.mxu0 0
        %998 = vmatpush1.bf16.msra.mxu0 0
        %999 = vmatprep.subr.bf16.mxu0 0
        %1000 = vmatpush1.bf16.msra.mxu0 0
        %1001 = vmatprep.subr.bf16.mxu0 0
        %1002 = vmatpush1.bf16.msra.mxu0 0
        %1003 = vmatprep.subr.bf16.mxu0 0
        %1004 = vmatpush1.bf16.msra.mxu0 0
        %1005 = vmatprep.subr.bf16.mxu0 0
        %1006 = vmatpush1.bf16.msra.mxu0 0
        %1007 = vmatprep.subr.bf16.mxu0 0
        %1008 = vmatpush1.bf16.msra.mxu0 0
        %1009 = vmatprep.subr.bf16.mxu0 0
        %1010 = vmatpush1.bf16.msra.mxu0 0
        %1011 = vmatprep.subr.bf16.mxu0 0
        %1012 = vmatpush1.bf16.msra.mxu0 0
        %1013 = vmatprep.mubr.bf16.mxu0 0
        %1014 = vmatmul.mubr.bf16.gmra.mrb[0].mxu0 %v931
        %v1015 = vpop.f32.mrb[0].mxu0
        %v1016 = vadd.f32 0.0, %v1015
        %v1017 = vpop.f32.mrb[0].mxu0
        %v1018 = vpop.f32.mrb[0].mxu0
        %v1019 = vadd.f32 0.0, %v1018
        %v1020 = vpop.f32.mrb[0].mxu0
        %1021 = vdwg.mxu0
        %v1022 = vadd.f32 %v904, %v1016
        %v1023 = vadd.f32 %v907, %v1019
        %v1024 = vld [vmem:[%s5] sm:$0x1]
        %v1026 = vlaneseq
        %v1027 = vshrl.u32 %v1026, 7
        %v1028 = vsub.s32 0, %v1027
        %v1029 = vrot.slane %v1024, %v1028
        %v1031 = vmul.f32 %v1022, %v1029
        %v1032 = vmul.f32 %v1023, %v1029
        %v1033 = vld [vmem:[%s6] sm:$0x1]
        %v1035 = vlaneseq
        %v1036 = vshrl.u32 %v1035, 7
        %v1037 = vsub.s32 0, %v1036
        %v1038 = vrot.slane %v1033, %v1037
        %v1040 = vadd.f32 %v1031, %v1038
        %v1041 = vadd.f32 %v1032, %v1038
        %v1042 = vmax.f32 %v1040, 0.0
        %v1043 = vmax.f32 %v1041, 0.0
        %v1046 = vrot.slane %v1042, 7
        %v1047 = vrot.slane %v1043, 7
        %v1048 = vsel %vm675, %v1046, %v1047
        %v1052 = vadd.f32 %v308, %v1046
        %v1053 = vadd.f32 %v309, %v1048
        %v1054 = vadd.f32 %v310, %v1047
        %1055 = vst [vmem:[%s301 - $0x1] sm:$0xfe] %v1052
        %1056 = vst [vmem:[%s301 + $0x7] sm:$0xff] %v1053
        %1057 = vst [vmem:[%s301 + $0xf] sm:$0x1] %v1054
        %s1058 = sand.u32 %s183, 1
        %s1059 = scalar_lea.sflag [#allocation4], %s1058
        %s1060 = sand.u32 %s183, 1
        %s1061 = smul.addr %s1060, 16
        %s1062 = scalar_lea.vmem [#allocation7], %s1061
        // Predicated region
        $region57: #{tpu_custom_call.1} parent=47 // pred_check
          %p1063 = pneg %p193
        $region58: #{tpu_custom_call.1} parent=47 // pred_check_branch
          %1065 = sbr.rel (%p1063) target = $region60
        $region59: #{tpu_custom_call.1} parent=47 // pred_region
          %s1067 = ssub.s32 256, 256
          %1068 = vsyncadd %s1059, %s1067
          %s1069 = smul.addr %s23, 2
          %s1070 = smul.addr %s1069, 128
          %s1071 = scalar_lea.hbm %s7, %s1070
          %s1072 = sshll.u32 %s1062, 4
          %s1073 = int_to_ptr.vmem [resolvable:$true] %s1072
          %1078 = dma.vmem_to_hbm [thread:$0]  %s1073, 256, %s1071, %s1059, 128, 128, 8
        $region60: #{tpu_custom_call.1} parent=47 // pred_fallthru
          _
      $region48: #{tpu_custom_call.1} parent=5 // pred_fallthru
        _
      %p1079 = scmp.le.s32.totalorder 2, %s18
      // Predicated region
      $region61: #{tpu_custom_call.1} parent=5 // pred_check
        %p1080 = pneg %p1079
      $region62: #{tpu_custom_call.1} parent=5 // pred_check_branch
        %1082 = sbr.rel (%p1080) target = $region64
      $region63: #{tpu_custom_call.1} parent=5 // pred_region
        %s1083 = ssub.s32 %s18, 2
        // Predicated region
        $region65: #{tpu_custom_call.1} parent=63 // pred_check
          %p1084 = pneg %p199
        $region66: #{tpu_custom_call.1} parent=63 // pred_check_branch
          %1086 = sbr.rel (%p1084) target = $region68
        $region67: #{tpu_custom_call.1} parent=63 // pred_region
          %s1087 = sand.u32 %s184, 1
          %s1088 = scalar_lea.sflag [#allocation4], %s1087
          %s1089 = sand.u32 %s184, 1
          %s1090 = smul.addr %s1089, 16
          %s1091 = scalar_lea.vmem [#allocation7], %s1090
          %1092 = dma.done %s1088, 256
        $region68: #{tpu_custom_call.1} parent=63 // pred_fallthru
          _
      $region64: #{tpu_custom_call.1} parent=5 // pred_fallthru
        _
    $region6: #{tpu_custom_call.1} parent=1 // loop_footer
      %s22 = sadd.s32 1, %s18
    $region7: #{tpu_custom_call.1} parent=1 // loop_footer_branch
      %17 = sbr.rel target = $region3
    $region8: #{tpu_custom_call.1} parent=1 // loop_exit
      _
    %1093 = vsyncpa [#allocation3], 1
    %s1094 = scalar_lea.sflag [#allocation3], 1
    %1095 = vsyncpa %s1094, 1
    %1096 = vsyncpa [#allocation6], 1
    %1097 = vsyncpa [#allocation4], 1
    %s1098 = scalar_lea.sflag [#allocation4], 1
    %1099 = vsyncpa %s1098, 1

</llo_original>
